<compile_context>
chip_gen: v6e
topology: v6e:2x2x1
jax: 0.10.0
libtpu: 0.0.40
codegen_flags: <defaults>
</compile_context>

<pallas_src>
import jax
import jax.numpy as jnp
from jax.experimental import pallas as pl
from jax.experimental.pallas import tpu as pltpu


def _conv_stats_kernel(p_ref, w_ref, y_ref, stats_ref):
    """One row-tile of the im2col matmul + per-tile channel statistics.

    p_ref:     (TM, K)       im2col patch rows
    w_ref:     (K, Cpad)     flattened conv weight (resident across the grid)
    y_ref:     (TM, Cpad)    f32 conv output tile
    stats_ref: (1, 8, Cpad)  row 0 = per-channel sum, row 1 = sum of squares
    """
    y = jnp.dot(p_ref[...], w_ref[...], preferred_element_type=jnp.float32)
    y_ref[...] = y
    s = jnp.sum(y, axis=0, keepdims=True)          # (1, Cpad)
    ss = jnp.sum(y * y, axis=0, keepdims=True)     # (1, Cpad)
    pad_rows = jnp.zeros((6, y.shape[1]), jnp.float32)
    stats_ref[...] = jnp.concatenate([s, ss, pad_rows], axis=0)[None]


def _bn_silu_kernel(y_ref, scale_ref, shift_ref, o_ref):
    """Fused affine BN (precomputed scale/shift) + SiLU on one lane-dense tile."""
    z = y_ref[...] * scale_ref[...] + shift_ref[...]
    o_ref[...] = z * jax.nn.sigmoid(z)             # sigmoid -> EUP, mul -> VPU


def base_conv_t_forward(x_nchw, weight_oihw, gamma, beta, *, stride, eps=1e-5,
                        tile_rows=256):
    """Forward of BaseConv_t: SiLU(BN(Conv2d(x))), BN in training mode."""
    N, Cin, H, W = x_nchw.shape
    Cout, w_cin, KH, KW = weight_oihw.shape
    assert w_cin == Cin  # TODO(synk): grouped conv (groups > 1) not implemented; module default is groups=1.
    pad = (KH - 1) // 2
    Ho = (H + 2 * pad - KH) // stride + 1
    Wo = (W + 2 * pad - KW) // stride + 1

    # NCHW -> NHWC (channels on the 128-lane axis) + spatial zero pad (XLA glue).
    x = jnp.transpose(x_nchw, (0, 2, 3, 1)).astype(jnp.float32)
    x_pad = jnp.pad(x, ((0, 0), (pad, pad), (pad, pad), (0, 0)))

    # im2col in the wrapper: one dense (rows, KH*KW*Cin) operand so the kernel
    # does a single deep matmul with no in-kernel strided-slice copies.
    cols = []
    for kh in range(KH):
        for kw in range(KW):
            cols.append(x_pad[:, kh:kh + (Ho - 1) * stride + 1:stride,
                                 kw:kw + (Wo - 1) * stride + 1:stride, :])
    K = KH * KW * Cin
    M = N * Ho * Wo
    patches = jnp.concatenate(cols, axis=-1).reshape(M, K)

    TM = tile_rows
    num_tiles = pl.cdiv(M, TM)
    M_pad = num_tiles * TM
    Cpad = ((Cout + 127) // 128) * 128

    # Zero row padding: padded rows give y == 0, contributing nothing to the
    # channel sums; the true M normalizes the statistics below.
    patches = jnp.pad(patches, ((0, M_pad - M), (0, 0)))
    wmat = jnp.transpose(weight_oihw, (2, 3, 1, 0)).reshape(K, Cout)
    wmat = jnp.pad(wmat.astype(jnp.float32), ((0, 0), (0, Cpad - Cout)))
    # NOTE: patches/wmat could be cast to bfloat16 here (f32 MXU accumulate)
    # for ~2x HBM/VMEM savings; kept f32 to preserve the module's f32 numerics.

    y2d, stats = pl.pallas_call(
        _conv_stats_kernel,
        out_shape=(jax.ShapeDtypeStruct((M_pad, Cpad), jnp.float32),
                   jax.ShapeDtypeStruct((num_tiles, 8, Cpad), jnp.float32)),
        grid=(num_tiles,),
        in_specs=[
            pl.BlockSpec((TM, K), lambda i: (i, 0)),
            pl.BlockSpec((K, Cpad), lambda i: (0, 0)),   # weight: resident
        ],
        out_specs=(
            pl.BlockSpec((TM, Cpad), lambda i: (i, 0)),
            pl.BlockSpec((1, 8, Cpad), lambda i: (i, 0, 0)),
        ),
        compiler_params=pltpu.CompilerParams(
            dimension_semantics=("parallel",)),
    )(patches, wmat)

    # Tiny (num_tiles x Cout) reduction + scale/shift: plain-JAX glue.
    ch_sum = jnp.sum(stats[:, 0, :Cout], axis=0)
    ch_sumsq = jnp.sum(stats[:, 1, :Cout], axis=0)
    mean = ch_sum / M
    var = jnp.maximum(ch_sumsq / M - mean * mean, 0.0)   # biased var (BN train)
    scale = gamma.astype(jnp.float32) * jax.lax.rsqrt(var + eps)
    shift = beta.astype(jnp.float32) - mean * scale
    scale_p = jnp.pad(scale, (0, Cpad - Cout)).reshape(1, Cpad)
    shift_p = jnp.pad(shift, (0, Cpad - Cout)).reshape(1, Cpad)

    out2d = pl.pallas_call(
        _bn_silu_kernel,
        out_shape=jax.ShapeDtypeStruct((M_pad, Cpad), jnp.float32),
        grid=(num_tiles,),
        in_specs=[
            pl.BlockSpec((TM, Cpad), lambda i: (i, 0)),
            pl.BlockSpec((1, Cpad), lambda i: (0, 0)),
            pl.BlockSpec((1, Cpad), lambda i: (0, 0)),
        ],
        out_specs=pl.BlockSpec((TM, Cpad), lambda i: (i, 0)),
        compiler_params=pltpu.CompilerParams(
            dimension_semantics=("parallel",)),
    )(y2d, scale_p, shift_p)

    # Strip row/channel padding, NHWC -> NCHW to match the PyTorch convention.
    out_nhwc = out2d[:M, :Cout].reshape(N, Ho, Wo, Cout)
    return jnp.transpose(out_nhwc, (0, 3, 1, 2))


def _reference(x_nchw, weight_oihw, gamma, beta, *, stride, eps=1e-5):
    """Plain-JAX reference of the same forward pass (for sanity check only)."""
    KH = weight_oihw.shape[2]
    pad = (KH - 1) // 2
    y = jax.lax.conv_general_dilated(
        x_nchw.astype(jnp.float32), weight_oihw.astype(jnp.float32),
        window_strides=(stride, stride),
        padding=[(pad, pad), (pad, pad)],
        dimension_numbers=("NCHW", "OIHW", "NCHW"),
    )
    mean = jnp.mean(y, axis=(0, 2, 3), keepdims=True)
    var = jnp.mean((y - mean) ** 2, axis=(0, 2, 3), keepdims=True)
    z = (y - mean) / jnp.sqrt(var + eps)
    z = z * gamma.reshape(1, -1, 1, 1) + beta.reshape(1, -1, 1, 1)
    return z * jax.nn.sigmoid(z)


if __name__ == "__main__":
    # BaseConv_t(in_channels=4, out_channels=8, ksize=3, stride=1, act='silu')
    N, Cin, H, W = 2, 4, 16, 16
    Cout, ksize, stride = 8, 3, 1

    key = jax.random.PRNGKey(0)
    kx, kw = jax.random.split(key)
    x = jax.random.normal(kx, (N, Cin, H, W), dtype=jnp.float32)
    # Deterministic kaiming-like conv weight; conv bias=False as in BaseConv_t.
    fan_in = Cin * ksize * ksize
    weight = jax.random.normal(kw, (Cout, Cin, ksize, ksize), dtype=jnp.float32)
    weight = weight * jnp.sqrt(2.0 / fan_in)
    gamma = jnp.ones((Cout,), jnp.float32)   # BatchNorm2d default weight
    beta = jnp.zeros((Cout,), jnp.float32)   # BatchNorm2d default bias

    out = base_conv_t_forward(x, weight, gamma, beta, stride=stride)
    out = jax.block_until_ready(out)

    ref = _reference(x, weight, gamma, beta, stride=stride)
    assert out.shape == (N, Cout, H, W)
    assert jnp.allclose(out, ref, atol=1e-4, rtol=1e-4), "mismatch vs reference"

    print("KERNEL_OK")
</pallas_src>

<mosaic_0001>
module attributes {stable_mosaic.version = 11 : i64} {
  func.func @_conv_stats_kernel(%arg0: i32, %arg1: memref<256x36xf32, #tpu.memory_space<vmem>>, %arg2: memref<36x128xf32, #tpu.memory_space<vmem>>, %arg3: memref<256x128xf32, #tpu.memory_space<vmem>>, %arg4: memref<1x8x128xf32, #tpu.memory_space<vmem>>) attributes {dimension_semantics = [#tpu.dimension_semantics<parallel>], iteration_bounds = array<i64: 2>, scalar_prefetch = 0 : i64, scratch_operands = 0 : i64, tpu.core_type = #tpu.core_type<tc>, window_params = [{transform_indices = @transform_0, window_bounds = array<i64: 256, 36>}, {pipeline_mode = #tpu.pipeline_mode<synchronous>, transform_indices = @transform_1, window_bounds = array<i64: 36, 128>}, {transform_indices = @transform_2, window_bounds = array<i64: 256, 128>}, {transform_indices = @transform_3, window_bounds = array<i64: 1, 8, 128>}]} {
    %c0 = arith.constant 0 : index
    %c0_0 = arith.constant 0 : index
    %0 = vector.load %arg1[%c0, %c0_0] : memref<256x36xf32, #tpu.memory_space<vmem>>, vector<256x36xf32>
    %c0_1 = arith.constant 0 : index
    %c0_2 = arith.constant 0 : index
    %1 = vector.load %arg2[%c0_1, %c0_2] : memref<36x128xf32, #tpu.memory_space<vmem>>, vector<36x128xf32>
    %cst = arith.constant dense<0.000000e+00> : vector<256x128xf32>
    %2 = tpu.matmul %0, %1, %cst {dimension_numbers = #tpu.dot_dimension_numbers<[1], [0], [0], [1], [0, 0, 1, 1], [], []>} : vector<256x36xf32>, vector<36x128xf32>, vector<256x128xf32> -> vector<256x128xf32>
    %c0_3 = arith.constant 0 : index
    %c0_4 = arith.constant 0 : index
    %3 = vector.load %arg3[%c0_3, %c0_4] : memref<256x128xf32, #tpu.memory_space<vmem>>, vector<256x128xf32>
    tpu.vector_store %arg3[%c0_3, %c0_4], %2 {strides = array<i32>} : memref<256x128xf32, #tpu.memory_space<vmem>>, vector<256x128xf32>,
    %cst_5 = arith.constant dense<0.000000e+00> : vector<128xf32>
    %4 = vector.multi_reduction <add>, %2, %cst_5 [0] : vector<256x128xf32> to vector<128xf32>
    %5 = vector.shape_cast %4 : vector<128xf32> to vector<1x128xf32>
    %6 = arith.mulf %2, %2 : vector<256x128xf32>
    %cst_6 = arith.constant dense<0.000000e+00> : vector<128xf32>
    %7 = vector.multi_reduction <add>, %6, %cst_6 [0] : vector<256x128xf32> to vector<128xf32>
    %8 = vector.shape_cast %7 : vector<128xf32> to vector<1x128xf32>
    %cst_7 = arith.constant 0.000000e+00 : f32
    %9 = vector.broadcast %cst_7 : f32 to vector<6x128xf32>
    %10 = tpu.concatenate %5, %8, %9 in 0 : vector<1x128xf32>, vector<1x128xf32>, vector<6x128xf32> -> vector<8x128xf32>
    %11 = vector.shape_cast %10 : vector<8x128xf32> to vector<1x8x128xf32>
    %c0_8 = arith.constant 0 : index
    %c0_9 = arith.constant 0 : index
    %c0_10 = arith.constant 0 : index
    %12 = vector.load %arg4[%c0_8, %c0_9, %c0_10] : memref<1x8x128xf32, #tpu.memory_space<vmem>>, vector<1x8x128xf32>
    tpu.vector_store %arg4[%c0_8, %c0_9, %c0_10], %11 {strides = array<i32>} : memref<1x8x128xf32, #tpu.memory_space<vmem>>, vector<1x8x128xf32>,
    return
  }
  func.func @transform_0(%arg0: i32) -> (i32, i32) {
    %c0_i32 = arith.constant 0 : i32
    %c0_i32_0 = arith.constant 0 : i32
    return %arg0, %c0_i32 : i32, i32
  }
  func.func @transform_1(%arg0: i32) -> (i32, i32) {
    %c0_i32 = arith.constant 0 : i32
    %c0_i32_0 = arith.constant 0 : i32
    %c0_i32_1 = arith.constant 0 : i32
    return %c0_i32, %c0_i32_0 : i32, i32
  }
  func.func @transform_2(%arg0: i32) -> (i32, i32) {
    %c0_i32 = arith.constant 0 : i32
    %c0_i32_0 = arith.constant 0 : i32
    return %arg0, %c0_i32 : i32, i32
  }
  func.func @transform_3(%arg0: i32) -> (i32, i32, i32) {
    %c0_i32 = arith.constant 0 : i32
    %c0_i32_0 = arith.constant 0 : i32
    %c0_i32_1 = arith.constant 0 : i32
    return %arg0, %c0_i32, %c0_i32_0 : i32, i32, i32
  }
}

</mosaic_0001>

<llo_original>
// kernel: tpu_custom_call.1
$region0: #{tpu_custom_call.1}
  #allocation0 [shape = 'u32[]', space=smem, size = 0x4, offset = 0x4, fixed_abs, tag = 'smem constant byte address 0x4 - core index']
  #allocation1 [shape = 'u32[144,128]{1,0:T(1,128)}', space=vmem, size = 0x12000, scoped, tag = 'internal scratch']
  %s0 = inlined_call_operand.vmem [shape: f32[512,36], index: 0, kind: input, shape index: {}]
  %s1 = inlined_call_operand.vmem [shape: f32[36,128], index: 1, kind: input, shape index: {}]
  %s2 = inlined_call_operand.hbm [shape: f32[512,128], index: 2, kind: output, shape index: {0}]
  %s3 = inlined_call_operand.hbm [shape: f32[2,8,128], index: 3, kind: output, shape index: {1}]
  %4 = xla_tuple %s2, %s3
  %s5 = sld [smem:[#allocation0]]
  $region49: #{tpu_custom_call.1} parent=0
    _
  %s7 = ssub.s32 1, %s5
  %s8 = scalar_select 0, %s7, %s5
  $region1: #{tpu_custom_call.1} parent=0
    #allocation2 [shape = 'u8[262144]{0}', space=vmem, size = 0x40000, scoped, tag = 'output window, operand 0']
    #allocation3 [shape = 's32[2]{0}', space=sflag, size = 0x8, scoped, tag = 'scoped memory for tpu_custom_call.1']
    #allocation4 [shape = 'u8[8192]{0}', space=vmem, size = 0x2000, scoped, tag = 'output window, operand 1']
    #allocation5 [shape = 's32[2]{0}', space=sflag, size = 0x8, scoped, tag = 'scoped memory for tpu_custom_call.1']
    %9 = vsyncpa [#allocation3], 0
    %s10 = scalar_lea.sflag [#allocation3], 1
    %11 = vsyncpa %s10, 0
    %12 = vsyncpa [#allocation5], 0
    %s13 = scalar_lea.sflag [#allocation5], 1
    %14 = vsyncpa %s13, 0
    loop: start=0, step=1, limit=4
    $region2: #{tpu_custom_call.1} parent=1 // loop_pre_header
      _
    $region3: #{tpu_custom_call.1} parent=1 // loop_header
      %s16 = sphi 0, %s20
      %p17 = scmp.ge.s32.totalorder %s16, 4
      %s26 = sphi 0, %s28
      %s29 = sphi 0, %s26
      %s30 = sphi 0, %s29
      %s46 = sphi 0, %s30
      %s50 = sphi 0, %s50
      %s52 = sphi 0, %s50
      %s53 = sphi 0, %s52
      %s67 = sphi 0, %s53
      %s73 = sphi 0, %s75
      %s76 = sphi 0, %s73
      %s77 = sphi 0, %s76
      %s93 = sphi 0, %s77
      %s99 = sphi 0, %s101
      %s102 = sphi 0, %s99
      %s103 = sphi 0, %s102
      %s119 = sphi 0, %s103
    $region4: #{tpu_custom_call.1} parent=1 // loop_header_branch
      %19 = sbr.rel (%p17) target = $region8
    $region5: #{tpu_custom_call.1} parent=1 // loop_body
      %s21 = ssub.s32 %s16, 1
      %s22 = ssub.s32 %s16, 2
      %s23 = sadd.s32 %s16, 1
      %s24 = ssub.s32 %s16, %s23
      %p25 = scmp.eq.s32.totalorder %s24, 0
      %s27 = sadd.s32 %s26, 1
      %s28 = scalar_select %p25, %s26, %s27
      %p31 = pneg %p25
      %p32 = scmp.eq.s32.totalorder %s16, 1
      %p33 = por %p31, %p32
      %p34 = scmp.ne.s32.totalorder %s26, %s29
      %p35 = scmp.eq.s32.totalorder %s16, 0
      %p36 = por %p34, %p35
      %p37 = scmp.ne.s32.totalorder %s26, %s29
      %p38 = scmp.eq.s32.totalorder %s21, 1
      %p39 = por %p37, %p38
      %p40 = scmp.ne.s32.totalorder %s29, %s30
      %p41 = scmp.eq.s32.totalorder %s21, 0
      %p42 = por %p40, %p41
      %p43 = scmp.ne.s32.totalorder %s29, %s30
      %p44 = scmp.eq.s32.totalorder %s22, 1
      %p45 = por %p43, %p44
      %p47 = scmp.ne.s32.totalorder %s30, %s46
      %p48 = scmp.eq.s32.totalorder %s22, 0
      %p49 = por %p47, %p48
      %s51 = sadd.s32 %s50, 1
      %p54 = scmp.eq.s32.totalorder %s16, 1
      %p55 = scmp.ne.s32.totalorder %s50, %s52
      %p56 = scmp.eq.s32.totalorder %s16, 0
      %p57 = por %p55, %p56
      %p58 = scmp.ne.s32.totalorder %s50, %s52
      %p59 = scmp.eq.s32.totalorder %s21, 1
      %p60 = por %p58, %p59
      %p61 = scmp.ne.s32.totalorder %s52, %s53
      %p62 = scmp.eq.s32.totalorder %s21, 0
      %p63 = por %p61, %p62
      %p64 = scmp.ne.s32.totalorder %s52, %s53
      %p65 = scmp.eq.s32.totalorder %s22, 1
      %p66 = por %p64, %p65
      %p68 = scmp.ne.s32.totalorder %s53, %s67
      %p69 = scmp.eq.s32.totalorder %s22, 0
      %p70 = por %p68, %p69
      %s71 = ssub.s32 %s16, %s23
      %p72 = scmp.eq.s32.totalorder %s71, 0
      %s74 = sadd.s32 %s73, 1
      %s75 = scalar_select %p72, %s73, %s74
      %p78 = pneg %p72
      %p79 = scmp.eq.s32.totalorder %s16, 1
      %p80 = por %p78, %p79
      %p81 = scmp.ne.s32.totalorder %s73, %s76
      %p82 = scmp.eq.s32.totalorder %s16, 0
      %p83 = por %p81, %p82
      %p84 = scmp.ne.s32.totalorder %s73, %s76
      %p85 = scmp.eq.s32.totalorder %s21, 1
      %p86 = por %p84, %p85
      %p87 = scmp.ne.s32.totalorder %s76, %s77
      %p88 = scmp.eq.s32.totalorder %s21, 0
      %p89 = por %p87, %p88
      %p90 = scmp.ne.s32.totalorder %s76, %s77
      %p91 = scmp.eq.s32.totalorder %s22, 1
      %p92 = por %p90, %p91
      %p94 = scmp.ne.s32.totalorder %s77, %s93
      %p95 = scmp.eq.s32.totalorder %s22, 0
      %p96 = por %p94, %p95
      %s97 = ssub.s32 %s16, %s23
      %p98 = scmp.eq.s32.totalorder %s97, 0
      %s100 = sadd.s32 %s99, 1
      %s101 = scalar_select %p98, %s99, %s100
      %p104 = pneg %p98
      %p105 = scmp.eq.s32.totalorder %s16, 1
      %p106 = por %p104, %p105
      %p107 = scmp.ne.s32.totalorder %s99, %s102
      %p108 = scmp.eq.s32.totalorder %s16, 0
      %p109 = por %p107, %p108
      %p110 = scmp.ne.s32.totalorder %s99, %s102
      %p111 = scmp.eq.s32.totalorder %s21, 1
      %p112 = por %p110, %p111
      %p113 = scmp.ne.s32.totalorder %s102, %s103
      %p114 = scmp.eq.s32.totalorder %s21, 0
      %p115 = por %p113, %p114
      %p116 = scmp.ne.s32.totalorder %s102, %s103
      %p117 = scmp.eq.s32.totalorder %s22, 1
      %p118 = por %p116, %p117
      %p120 = scmp.ne.s32.totalorder %s103, %s119
      %p121 = scmp.eq.s32.totalorder %s22, 0
      %p122 = por %p120, %p121
      %p123 = scmp.le.s32.totalorder 1, %s16
      %p124 = scmp.lt.s32.totalorder %s16, 3
      %p125 = pnand %p123, %p124
      %p126 = pneg %p125
      // Predicated region
      $region9: #{tpu_custom_call.1} parent=5 // pred_check
        _
      $region10: #{tpu_custom_call.1} parent=5 // pred_check_branch
        %128 = sbr.rel (%p125) target = $region12
      $region11: #{tpu_custom_call.1} parent=5 // pred_region
        %s129 = ssub.s32 %s16, 1
        // Predicated region
        $region13: #{tpu_custom_call.1} parent=11 // pred_check
          %p130 = pneg %p63
        $region14: #{tpu_custom_call.1} parent=11 // pred_check_branch
          %132 = sbr.rel (%p130) target = $region16
        $region15: #{tpu_custom_call.1} parent=11 // pred_region
          _
        $region16: #{tpu_custom_call.1} parent=11 // pred_fallthru
          _
      $region12: #{tpu_custom_call.1} parent=5 // pred_fallthru
        _
      %p133 = scmp.lt.s32.totalorder %s16, 2
      // Predicated region
      $region17: #{tpu_custom_call.1} parent=5 // pred_check
        %p134 = pneg %p133
      $region18: #{tpu_custom_call.1} parent=5 // pred_check_branch
        %136 = sbr.rel (%p134) target = $region20
      $region19: #{tpu_custom_call.1} parent=5 // pred_region
        // Predicated region
        $region21: #{tpu_custom_call.1} parent=19 // pred_check
          %p137 = pneg %p36
        $region22: #{tpu_custom_call.1} parent=19 // pred_check_branch
          %139 = sbr.rel (%p137) target = $region24
        $region23: #{tpu_custom_call.1} parent=19 // pred_region
          %s140 = smul.u32 32, %s16
          %p141 = scmp.lt.s32.totalorder %s140, 63
          %s142 = scalar_select %p141, %s140, 63
          %s143 = smul.addr %s142, 8
          %s144 = scalar_lea.vmem %s0, %s143
          %s145 = smul.u32 32, %s16
        $region24: #{tpu_custom_call.1} parent=19 // pred_fallthru
          _
      $region20: #{tpu_custom_call.1} parent=5 // pred_fallthru
        _
      %p146 = scmp.le.s32.totalorder 1, %s16
      %p147 = scmp.lt.s32.totalorder %s16, 3
      %p148 = pnand %p146, %p147
      %p149 = pneg %p148
      // Predicated region
      $region25: #{tpu_custom_call.1} parent=5 // pred_check
        _
      $region26: #{tpu_custom_call.1} parent=5 // pred_check_branch
        %151 = sbr.rel (%p148) target = $region28
      $region27: #{tpu_custom_call.1} parent=5 // pred_region
        %s152 = ssub.s32 %s16, 1
        %s153 = smul.u32 32, %s21
        %p154 = scmp.lt.s32.totalorder %s153, 63
        %s155 = scalar_select %p154, %s153, 63
        %s156 = smul.addr %s155, 8
        %s157 = scalar_lea.vmem %s0, %s156
        %p158 = pneg %p42
        %p159 = pneg %p39
        %p160 = pneg %p63
        %p161 = pneg %p60
        %p162 = pneg %p89
        %p163 = pneg %p86
        %s164 = sand.u32 %s76, 1
        %s165 = scalar_lea.sflag [#allocation3], %s164
        %s166 = sand.u32 %s76, 1
        %s167 = smul.addr %s166, 256
        %s168 = scalar_lea.vmem [#allocation2], %s167
        %p169 = pneg %p115
        %p170 = pneg %p112
        %s171 = sand.u32 %s102, 1
        %s172 = scalar_lea.sflag [#allocation5], %s171
        %s173 = sand.u32 %s102, 1
        %s174 = smul.addr %s173, 8
        %s175 = scalar_lea.vmem [#allocation4], %s174
        %s176 = smul.u32 32, %s21
        %p177 = scmp.lt.s32.totalorder %s176, 63
        %s178 = scalar_select %p177, %s176, 63
        %s179 = smul.addr %s178, 8
        %s180 = scalar_lea.vmem %s0, %s179
        %s181 = smul.u32 32, %s21
        %s182 = smul.u32 32, %s21
        %v183 = vld [vmem:[%s180] sm:$0xff]
        %v184 = vld [vmem:[%s180 + $0x8] sm:$0xff]
        %v185 = vld [vmem:[%s180 + $0x10] sm:$0xff]
        %v186 = vld [vmem:[%s180 + $0x18] sm:$0xff]
        %v187 = vld [vmem:[%s180 + $0x20] sm:$0xff]
        %v188 = vld [vmem:[%s180 + $0x28] sm:$0xff]
        %v189 = vld [vmem:[%s180 + $0x30] sm:$0xff]
        %v190 = vld [vmem:[%s180 + $0x38] sm:$0xff]
        %v191 = vld [vmem:[%s180 + $0x40] sm:$0xff]
        %v192 = vld [vmem:[%s180 + $0x48] sm:$0xff]
        %v193 = vld [vmem:[%s180 + $0x50] sm:$0xff]
        %v194 = vld [vmem:[%s180 + $0x58] sm:$0xff]
        %v195 = vld [vmem:[%s180 + $0x60] sm:$0xff]
        %v196 = vld [vmem:[%s180 + $0x68] sm:$0xff]
        %v197 = vld [vmem:[%s180 + $0x70] sm:$0xff]
        %v198 = vld [vmem:[%s180 + $0x78] sm:$0xff]
        %v199 = vld [vmem:[%s180 + $0x80] sm:$0xff]
        %v200 = vld [vmem:[%s180 + $0x88] sm:$0xff]
        %v201 = vld [vmem:[%s180 + $0x90] sm:$0xff]
        %v202 = vld [vmem:[%s180 + $0x98] sm:$0xff]
        %v203 = vld [vmem:[%s180 + $0xa0] sm:$0xff]
        %v204 = vld [vmem:[%s180 + $0xa8] sm:$0xff]
        %v205 = vld [vmem:[%s180 + $0xb0] sm:$0xff]
        %v206 = vld [vmem:[%s180 + $0xb8] sm:$0xff]
        %v207 = vld [vmem:[%s180 + $0xc0] sm:$0xff]
        %v208 = vld [vmem:[%s180 + $0xc8] sm:$0xff]
        %v209 = vld [vmem:[%s180 + $0xd0] sm:$0xff]
        %v210 = vld [vmem:[%s180 + $0xd8] sm:$0xff]
        %v211 = vld [vmem:[%s180 + $0xe0] sm:$0xff]
        %v212 = vld [vmem:[%s180 + $0xe8] sm:$0xff]
        %v213 = vld [vmem:[%s180 + $0xf0] sm:$0xff]
        %v214 = vld [vmem:[%s180 + $0xf8] sm:$0xff]
        %v215 = vld [vmem:[%s1] sm:$0xff]
        %v216 = vld [vmem:[%s1 + $0x8] sm:$0xff]
        %v217 = vld [vmem:[%s1 + $0x10] sm:$0xff]
        %v218 = vld [vmem:[%s1 + $0x18] sm:$0xff]
        %v219 = vld [vmem:[%s1 + $0x20] sm:$0xf]
        %vm220 = vcmask 293888
        %v222 = vsel %vm220, %v183, 0
        %v225 = vsel %vm220, %v184, 0
        %v228 = vsel %vm220, %v185, 0
        %v231 = vsel %vm220, %v186, 0
        %v234 = vsel %vm220, %v187, 0
        %v237 = vsel %vm220, %v188, 0
        %v240 = vsel %vm220, %v189, 0
        %v243 = vsel %vm220, %v190, 0
        %v246 = vsel %vm220, %v191, 0
        %v249 = vsel %vm220, %v192, 0
        %v252 = vsel %vm220, %v193, 0
        %v255 = vsel %vm220, %v194, 0
        %v258 = vsel %vm220, %v195, 0
        %v261 = vsel %vm220, %v196, 0
        %v264 = vsel %vm220, %v197, 0
        %v267 = vsel %vm220, %v198, 0
        %v270 = vsel %vm220, %v199, 0
        %v273 = vsel %vm220, %v200, 0
        %v276 = vsel %vm220, %v201, 0
        %v279 = vsel %vm220, %v202, 0
        %v282 = vsel %vm220, %v203, 0
        %v285 = vsel %vm220, %v204, 0
        %v288 = vsel %vm220, %v205, 0
        %v291 = vsel %vm220, %v206, 0
        %v294 = vsel %vm220, %v207, 0
        %v297 = vsel %vm220, %v208, 0
        %v300 = vsel %vm220, %v209, 0
        %v303 = vsel %vm220, %v210, 0
        %v306 = vsel %vm220, %v211, 0
        %v309 = vsel %vm220, %v212, 0
        %v312 = vsel %vm220, %v213, 0
        %v315 = vsel %vm220, %v214, 0
        %vm317 = vcmask 1043456
        %v319 = vsel %vm317, %v219, 0
        %321 = vmatprep.subr.mxu0 0.0
        %322 = vmatpush1.msra.mxu0 0.0
        %323 = vmatprep.subr.mxu0 0.0
        %324 = vmatpush1.msra.mxu0 0.0
        %325 = vmatprep.subr.mxu0 0.0
        %326 = vmatpush1.msra.mxu0 0.0
        %327 = vmatprep.subr.mxu0 0.0
        %328 = vmatpush1.msra.mxu0 0.0
        %329 = vmatprep.subr.mxu0 0.0
        %330 = vmatpush1.msra.mxu0 0.0
        %331 = vmatprep.subr.mxu0 0.0
        %332 = vmatpush1.msra.mxu0 0.0
        %333 = vmatprep.subr.mxu0 0.0
        %334 = vmatpush1.msra.mxu0 0.0
        %335 = vmatprep.subr.mxu0 0.0
        %336 = vmatpush1.msra.mxu0 0.0
        %337 = vmatprep.subr.mxu0 0.0
        %338 = vmatpush1.msra.mxu0 0.0
        %339 = vmatprep.subr.mxu0 0.0
        %340 = vmatpush1.msra.mxu0 0.0
        %341 = vmatprep.subr.mxu0 0.0
        %342 = vmatpush1.msra.mxu0 0.0
        %343 = vmatprep.subr.mxu0 0.0
        %344 = vmatpush1.msra.mxu0 %v319
        %345 = vmatprep.subr.mxu0 0.0
        %346 = vmatpush1.msra.mxu0 %v218
        %347 = vmatprep.subr.mxu0 0.0
        %348 = vmatpush1.msra.mxu0 %v217
        %349 = vmatprep.subr.mxu0 0.0
        %350 = vmatpush1.msra.mxu0 %v216
        %351 = vmatprep.subr.mxu0 0.0
        %352 = vmatpush1.msra.mxu0 %v215
        %353 = vmatprep.subr.mxu0 0.0
        %354 = vmatpush2.msra.mxu0 0.0
        %355 = vmatprep.subr.mxu0 0.0
        %356 = vmatpush2.msra.mxu0 0.0
        %357 = vmatprep.subr.mxu0 0.0
        %358 = vmatpush2.msra.mxu0 0.0
        %359 = vmatprep.subr.mxu0 0.0
        %360 = vmatpush2.msra.mxu0 0.0
        %361 = vmatprep.subr.mxu0 0.0
        %362 = vmatpush2.msra.mxu0 0.0
        %363 = vmatprep.subr.mxu0 0.0
        %364 = vmatpush2.msra.mxu0 0.0
        %365 = vmatprep.subr.mxu0 0.0
        %366 = vmatpush2.msra.mxu0 0.0
        %367 = vmatprep.subr.mxu0 0.0
        %368 = vmatpush2.msra.mxu0 0.0
        %369 = vmatprep.subr.mxu0 0.0
        %370 = vmatpush2.msra.mxu0 0.0
        %371 = vmatprep.subr.mxu0 0.0
        %372 = vmatpush2.msra.mxu0 0.0
        %373 = vmatprep.subr.mxu0 0.0
        %374 = vmatpush2.msra.mxu0 0.0
        %375 = vmatprep.subr.mxu0 0.0
        %376 = vmatpush2.msra.mxu0 0.0
        %377 = vmatprep.subr.mxu0 0.0
        %378 = vmatpush2.msra.mxu0 0.0
        %379 = vmatprep.subr.mxu0 0.0
        %380 = vmatpush2.msra.mxu0 0.0
        %381 = vmatprep.subr.mxu0 0.0
        %382 = vmatpush2.msra.mxu0 0.0
        %383 = vmatprep.subr.mxu0 0.0
        %384 = vmatpush2.msra.mxu0 0.0
        %385 = vmatprep.mubr.f32.mxu0 0.0
        %386 = vmatmul.mubr.f32.gmra.mxu0 %v222
        %v387 = vpop.f32.mrf.mxu0
        %v388 = vadd.f32 0.0, %v387
        %v389 = vpop.f32.mrf.mxu0
        %390 = vmatprep.mubr.f32.mxu0 0.0
        %391 = vmatmul.mubr.f32.gmra.mxu0 %v225
        %v392 = vpop.f32.mrf.mxu0
        %v393 = vadd.f32 0.0, %v392
        %v394 = vpop.f32.mrf.mxu0
        %395 = vmatprep.mubr.f32.mxu0 0.0
        %396 = vmatmul.mubr.f32.gmra.mxu0 %v228
        %v397 = vpop.f32.mrf.mxu0
        %v398 = vadd.f32 0.0, %v397
        %v399 = vpop.f32.mrf.mxu0
        %400 = vmatprep.mubr.f32.mxu0 0.0
        %401 = vmatmul.mubr.f32.gmra.mxu0 %v231
        %v402 = vpop.f32.mrf.mxu0
        %v403 = vadd.f32 0.0, %v402
        %v404 = vpop.f32.mrf.mxu0
        %405 = vmatprep.mubr.f32.mxu0 0.0
        %406 = vmatmul.mubr.f32.gmra.mxu0 %v234
        %v407 = vpop.f32.mrf.mxu0
        %v408 = vadd.f32 0.0, %v407
        %v409 = vpop.f32.mrf.mxu0
        %410 = vmatprep.mubr.f32.mxu0 0.0
        %411 = vmatmul.mubr.f32.gmra.mxu0 %v237
        %v412 = vpop.f32.mrf.mxu0
        %v413 = vadd.f32 0.0, %v412
        %v414 = vpop.f32.mrf.mxu0
        %415 = vmatprep.mubr.f32.mxu0 0.0
        %416 = vmatmul.mubr.f32.gmra.mxu0 %v240
        %v417 = vpop.f32.mrf.mxu0
        %v418 = vadd.f32 0.0, %v417
        %v419 = vpop.f32.mrf.mxu0
        %420 = vmatprep.mubr.f32.mxu0 0.0
        %421 = vmatmul.mubr.f32.gmra.mxu0 %v243
        %v422 = vpop.f32.mrf.mxu0
        %v423 = vadd.f32 0.0, %v422
        %v424 = vpop.f32.mrf.mxu0
        %425 = vmatprep.mubr.f32.mxu0 0.0
        %426 = vmatmul.mubr.f32.gmra.mxu0 %v246
        %v427 = vpop.f32.mrf.mxu0
        %v428 = vadd.f32 0.0, %v427
        %v429 = vpop.f32.mrf.mxu0
        %430 = vmatprep.mubr.f32.mxu0 0.0
        %431 = vmatmul.mubr.f32.gmra.mxu0 %v249
        %v432 = vpop.f32.mrf.mxu0
        %v433 = vadd.f32 0.0, %v432
        %v434 = vpop.f32.mrf.mxu0
        %435 = vmatprep.mubr.f32.mxu0 0.0
        %436 = vmatmul.mubr.f32.gmra.mxu0 %v252
        %v437 = vpop.f32.mrf.mxu0
        %v438 = vadd.f32 0.0, %v437
        %v439 = vpop.f32.mrf.mxu0
        %440 = vmatprep.mubr.f32.mxu0 0.0
        %441 = vmatmul.mubr.f32.gmra.mxu0 %v255
        %v442 = vpop.f32.mrf.mxu0
        %v443 = vadd.f32 0.0, %v442
        %v444 = vpop.f32.mrf.mxu0
        %445 = vmatprep.mubr.f32.mxu0 0.0
        %446 = vmatmul.mubr.f32.gmra.mxu0 %v258
        %v447 = vpop.f32.mrf.mxu0
        %v448 = vadd.f32 0.0, %v447
        %v449 = vpop.f32.mrf.mxu0
        %450 = vmatprep.mubr.f32.mxu0 0.0
        %451 = vmatmul.mubr.f32.gmra.mxu0 %v261
        %v452 = vpop.f32.mrf.mxu0
        %v453 = vadd.f32 0.0, %v452
        %v454 = vpop.f32.mrf.mxu0
        %455 = vmatprep.mubr.f32.mxu0 0.0
        %456 = vmatmul.mubr.f32.gmra.mxu0 %v264
        %v457 = vpop.f32.mrf.mxu0
        %v458 = vadd.f32 0.0, %v457
        %v459 = vpop.f32.mrf.mxu0
        %460 = vmatprep.mubr.f32.mxu0 0.0
        %461 = vmatmul.mubr.f32.gmra.mxu0 %v267
        %v462 = vpop.f32.mrf.mxu0
        %v463 = vadd.f32 0.0, %v462
        %v464 = vpop.f32.mrf.mxu0
        %465 = vmatprep.mubr.f32.mxu0 0.0
        %466 = vmatmul.mubr.f32.gmra.mxu0 %v270
        %v467 = vpop.f32.mrf.mxu0
        %v468 = vadd.f32 0.0, %v467
        %v469 = vpop.f32.mrf.mxu0
        %470 = vmatprep.mubr.f32.mxu0 0.0
        %471 = vmatmul.mubr.f32.gmra.mxu0 %v273
        %v472 = vpop.f32.mrf.mxu0
        %v473 = vadd.f32 0.0, %v472
        %v474 = vpop.f32.mrf.mxu0
        %475 = vmatprep.mubr.f32.mxu0 0.0
        %476 = vmatmul.mubr.f32.gmra.mxu0 %v276
        %v477 = vpop.f32.mrf.mxu0
        %v478 = vadd.f32 0.0, %v477
        %v479 = vpop.f32.mrf.mxu0
        %480 = vmatprep.mubr.f32.mxu0 0.0
        %481 = vmatmul.mubr.f32.gmra.mxu0 %v279
        %v482 = vpop.f32.mrf.mxu0
        %v483 = vadd.f32 0.0, %v482
        %v484 = vpop.f32.mrf.mxu0
        %485 = vmatprep.mubr.f32.mxu0 0.0
        %486 = vmatmul.mubr.f32.gmra.mxu0 %v282
        %v487 = vpop.f32.mrf.mxu0
        %v488 = vadd.f32 0.0, %v487
        %v489 = vpop.f32.mrf.mxu0
        %490 = vmatprep.mubr.f32.mxu0 0.0
        %491 = vmatmul.mubr.f32.gmra.mxu0 %v285
        %v492 = vpop.f32.mrf.mxu0
        %v493 = vadd.f32 0.0, %v492
        %v494 = vpop.f32.mrf.mxu0
        %495 = vmatprep.mubr.f32.mxu0 0.0
        %496 = vmatmul.mubr.f32.gmra.mxu0 %v288
        %v497 = vpop.f32.mrf.mxu0
        %v498 = vadd.f32 0.0, %v497
        %v499 = vpop.f32.mrf.mxu0
        %500 = vmatprep.mubr.f32.mxu0 0.0
        %501 = vmatmul.mubr.f32.gmra.mxu0 %v291
        %v502 = vpop.f32.mrf.mxu0
        %v503 = vadd.f32 0.0, %v502
        %v504 = vpop.f32.mrf.mxu0
        %505 = vmatprep.mubr.f32.mxu0 0.0
        %506 = vmatmul.mubr.f32.gmra.mxu0 %v294
        %v507 = vpop.f32.mrf.mxu0
        %v508 = vadd.f32 0.0, %v507
        %v509 = vpop.f32.mrf.mxu0
        %510 = vmatprep.mubr.f32.mxu0 0.0
        %511 = vmatmul.mubr.f32.gmra.mxu0 %v297
        %v512 = vpop.f32.mrf.mxu0
        %v513 = vadd.f32 0.0, %v512
        %v514 = vpop.f32.mrf.mxu0
        %515 = vmatprep.mubr.f32.mxu0 0.0
        %516 = vmatmul.mubr.f32.gmra.mxu0 %v300
        %v517 = vpop.f32.mrf.mxu0
        %v518 = vadd.f32 0.0, %v517
        %v519 = vpop.f32.mrf.mxu0
        %520 = vmatprep.mubr.f32.mxu0 0.0
        %521 = vmatmul.mubr.f32.gmra.mxu0 %v303
        %v522 = vpop.f32.mrf.mxu0
        %v523 = vadd.f32 0.0, %v522
        %v524 = vpop.f32.mrf.mxu0
        %525 = vmatprep.mubr.f32.mxu0 0.0
        %526 = vmatmul.mubr.f32.gmra.mxu0 %v306
        %v527 = vpop.f32.mrf.mxu0
        %v528 = vadd.f32 0.0, %v527
        %v529 = vpop.f32.mrf.mxu0
        %530 = vmatprep.mubr.f32.mxu0 0.0
        %531 = vmatmul.mubr.f32.gmra.mxu0 %v309
        %v532 = vpop.f32.mrf.mxu0
        %v533 = vadd.f32 0.0, %v532
        %v534 = vpop.f32.mrf.mxu0
        %535 = vmatprep.mubr.f32.mxu0 0.0
        %536 = vmatmul.mubr.f32.gmra.mxu0 %v312
        %v537 = vpop.f32.mrf.mxu0
        %v538 = vadd.f32 0.0, %v537
        %v539 = vpop.f32.mrf.mxu0
        %540 = vmatprep.mubr.f32.mxu0 0.0
        %541 = vmatmul.mubr.f32.gmra.mxu0 %v315
        %v542 = vpop.f32.mrf.mxu0
        %v543 = vadd.f32 0.0, %v542
        %v544 = vpop.f32.mrf.mxu0
        %545 = vdwg.mxu0
        %546 = vst [vmem:[%s168] sm:$0xff] %v388
        %547 = vst [vmem:[%s168 + $0x8] sm:$0xff] %v393
        %548 = vst [vmem:[%s168 + $0x10] sm:$0xff] %v398
        %549 = vst [vmem:[%s168 + $0x18] sm:$0xff] %v403
        %550 = vst [vmem:[%s168 + $0x20] sm:$0xff] %v408
        %551 = vst [vmem:[%s168 + $0x28] sm:$0xff] %v413
        %552 = vst [vmem:[%s168 + $0x30] sm:$0xff] %v418
        %553 = vst [vmem:[%s168 + $0x38] sm:$0xff] %v423
        %554 = vst [vmem:[%s168 + $0x40] sm:$0xff] %v428
        %555 = vst [vmem:[%s168 + $0x48] sm:$0xff] %v433
        %556 = vst [vmem:[%s168 + $0x50] sm:$0xff] %v438
        %557 = vst [vmem:[%s168 + $0x58] sm:$0xff] %v443
        %558 = vst [vmem:[%s168 + $0x60] sm:$0xff] %v448
        %559 = vst [vmem:[%s168 + $0x68] sm:$0xff] %v453
        %560 = vst [vmem:[%s168 + $0x70] sm:$0xff] %v458
        %561 = vst [vmem:[%s168 + $0x78] sm:$0xff] %v463
        %562 = vst [vmem:[%s168 + $0x80] sm:$0xff] %v468
        %563 = vst [vmem:[%s168 + $0x88] sm:$0xff] %v473
        %564 = vst [vmem:[%s168 + $0x90] sm:$0xff] %v478
        %565 = vst [vmem:[%s168 + $0x98] sm:$0xff] %v483
        %566 = vst [vmem:[%s168 + $0xa0] sm:$0xff] %v488
        %567 = vst [vmem:[%s168 + $0xa8] sm:$0xff] %v493
        %568 = vst [vmem:[%s168 + $0xb0] sm:$0xff] %v498
        %569 = vst [vmem:[%s168 + $0xb8] sm:$0xff] %v503
        %570 = vst [vmem:[%s168 + $0xc0] sm:$0xff] %v508
        %571 = vst [vmem:[%s168 + $0xc8] sm:$0xff] %v513
        %572 = vst [vmem:[%s168 + $0xd0] sm:$0xff] %v518
        %573 = vst [vmem:[%s168 + $0xd8] sm:$0xff] %v523
        %574 = vst [vmem:[%s168 + $0xe0] sm:$0xff] %v528
        %575 = vst [vmem:[%s168 + $0xe8] sm:$0xff] %v533
        %576 = vst [vmem:[%s168 + $0xf0] sm:$0xff] %v538
        %577 = vst [vmem:[%s168 + $0xf8] sm:$0xff] %v543
        %v578 = vadd.f32 %v388, %v393
        %v579 = vadd.f32 %v578, %v398
        %v580 = vadd.f32 %v579, %v403
        %v581 = vadd.f32 %v580, %v408
        %v582 = vadd.f32 %v581, %v413
        %v583 = vadd.f32 %v582, %v418
        %v584 = vadd.f32 %v583, %v423
        %v585 = vadd.f32 %v584, %v428
        %v586 = vadd.f32 %v585, %v433
        %v587 = vadd.f32 %v586, %v438
        %v588 = vadd.f32 %v587, %v443
        %v589 = vadd.f32 %v588, %v448
        %v590 = vadd.f32 %v589, %v453
        %v591 = vadd.f32 %v590, %v458
        %v592 = vadd.f32 %v591, %v463
        %v593 = vadd.f32 %v592, %v468
        %v594 = vadd.f32 %v593, %v473
        %v595 = vadd.f32 %v594, %v478
        %v596 = vadd.f32 %v595, %v483
        %v597 = vadd.f32 %v596, %v488
        %v598 = vadd.f32 %v597, %v493
        %v599 = vadd.f32 %v598, %v498
        %v600 = vadd.f32 %v599, %v503
        %v601 = vadd.f32 %v600, %v508
        %v602 = vadd.f32 %v601, %v513
        %v603 = vadd.f32 %v602, %v518
        %v604 = vadd.f32 %v603, %v523
        %v605 = vadd.f32 %v604, %v528
        %v606 = vadd.f32 %v605, %v533
        %v607 = vadd.f32 %v606, %v538
        %v608 = vadd.f32 %v607, %v543
        %v609 = vrot.slane %v608, 4
        %v610 = vadd.f32 %v608, %v609
        %v611 = vrot.slane %v610, 2
        %v612 = vadd.f32 %v610, %v611
        %v613 = vrot.slane %v612, 1
        %v614 = vadd.f32 %v612, %v613
        %v615 = vmul.f32 %v388, %v388
        %v616 = vmul.f32 %v393, %v393
        %v617 = vmul.f32 %v398, %v398
        %v618 = vmul.f32 %v403, %v403
        %v619 = vmul.f32 %v408, %v408
        %v620 = vmul.f32 %v413, %v413
        %v621 = vmul.f32 %v418, %v418
        %v622 = vmul.f32 %v423, %v423
        %v623 = vmul.f32 %v428, %v428
        %v624 = vmul.f32 %v433, %v433
        %v625 = vmul.f32 %v438, %v438
        %v626 = vmul.f32 %v443, %v443
        %v627 = vmul.f32 %v448, %v448
        %v628 = vmul.f32 %v453, %v453
        %v629 = vmul.f32 %v458, %v458
        %v630 = vmul.f32 %v463, %v463
        %v631 = vmul.f32 %v468, %v468
        %v632 = vmul.f32 %v473, %v473
        %v633 = vmul.f32 %v478, %v478
        %v634 = vmul.f32 %v483, %v483
        %v635 = vmul.f32 %v488, %v488
        %v636 = vmul.f32 %v493, %v493
        %v637 = vmul.f32 %v498, %v498
        %v638 = vmul.f32 %v503, %v503
        %v639 = vmul.f32 %v508, %v508
        %v640 = vmul.f32 %v513, %v513
        %v641 = vmul.f32 %v518, %v518
        %v642 = vmul.f32 %v523, %v523
        %v643 = vmul.f32 %v528, %v528
        %v644 = vmul.f32 %v533, %v533
        %v645 = vmul.f32 %v538, %v538
        %v646 = vmul.f32 %v543, %v543
        %v647 = vadd.f32 %v615, %v616
        %v648 = vadd.f32 %v647, %v617
        %v649 = vadd.f32 %v648, %v618
        %v650 = vadd.f32 %v649, %v619
        %v651 = vadd.f32 %v650, %v620
        %v652 = vadd.f32 %v651, %v621
        %v653 = vadd.f32 %v652, %v622
        %v654 = vadd.f32 %v653, %v623
        %v655 = vadd.f32 %v654, %v624
        %v656 = vadd.f32 %v655, %v625
        %v657 = vadd.f32 %v656, %v626
        %v658 = vadd.f32 %v657, %v627
        %v659 = vadd.f32 %v658, %v628
        %v660 = vadd.f32 %v659, %v629
        %v661 = vadd.f32 %v660, %v630
        %v662 = vadd.f32 %v661, %v631
        %v663 = vadd.f32 %v662, %v632
        %v664 = vadd.f32 %v663, %v633
        %v665 = vadd.f32 %v664, %v634
        %v666 = vadd.f32 %v665, %v635
        %v667 = vadd.f32 %v666, %v636
        %v668 = vadd.f32 %v667, %v637
        %v669 = vadd.f32 %v668, %v638
        %v670 = vadd.f32 %v669, %v639
        %v671 = vadd.f32 %v670, %v640
        %v672 = vadd.f32 %v671, %v641
        %v673 = vadd.f32 %v672, %v642
        %v674 = vadd.f32 %v673, %v643
        %v675 = vadd.f32 %v674, %v644
        %v676 = vadd.f32 %v675, %v645
        %v677 = vadd.f32 %v676, %v646
        %v678 = vrot.slane %v677, 4
        %v679 = vadd.f32 %v677, %v678
        %v680 = vrot.slane %v679, 2
        %v681 = vadd.f32 %v679, %v680
        %v682 = vrot.slane %v681, 1
        %v683 = vadd.f32 %v681, %v682
        %vm684 = vcmask 1040384
        %v685 = vsel %vm684, %v614, %v683
        %vm686 = vcmask 1041408
        %v687 = vsel %vm686, %v685, 0.0
        %688 = vst [vmem:[%s175] sm:$0xff] %v687
        %s689 = sand.u32 %s76, 1
        %s690 = scalar_lea.sflag [#allocation3], %s689
        %s691 = sand.u32 %s76, 1
        %s692 = smul.addr %s691, 256
        %s693 = scalar_lea.vmem [#allocation2], %s692
        %s694 = sand.u32 %s102, 1
        %s695 = scalar_lea.sflag [#allocation5], %s694
        %s696 = sand.u32 %s102, 1
        %s697 = smul.addr %s696, 8
        %s698 = scalar_lea.vmem [#allocation4], %s697
        // Predicated region
        $region29: #{tpu_custom_call.1} parent=27 // pred_check
          %p699 = pneg %p86
        $region30: #{tpu_custom_call.1} parent=27 // pred_check_branch
          %701 = sbr.rel (%p699) target = $region32
        $region31: #{tpu_custom_call.1} parent=27 // pred_region
          %s702 = smul.u32 32, %s21
          %s704 = ssub.s32 4096, 4096
          %705 = vsyncadd %s690, %s704
          %s706 = smul.addr %s702, 128
          %s707 = scalar_lea.hbm %s2, %s706
          %s708 = sshll.u32 %s693, 4
          %s709 = int_to_ptr.vmem [resolvable:$true] %s708
          %714 = dma.vmem_to_hbm [thread:$0]  %s709, 4096, %s707, %s690, 128, 128, 8
        $region32: #{tpu_custom_call.1} parent=27 // pred_fallthru
          _
        // Predicated region
        $region33: #{tpu_custom_call.1} parent=27 // pred_check
          %p715 = pneg %p112
        $region34: #{tpu_custom_call.1} parent=27 // pred_check_branch
          %717 = sbr.rel (%p715) target = $region36
        $region35: #{tpu_custom_call.1} parent=27 // pred_region
          %s719 = ssub.s32 128, 128
          %720 = vsyncadd %s695, %s719
          %s721 = smul.addr %s21, 128
          %s722 = scalar_lea.hbm %s3, %s721
          %s724 = sshll.u32 %s698, 4
          %s725 = int_to_ptr.vmem [resolvable:$true] %s724
          %727 = dma.vmem_to_hbm [thread:$0]  %s725, 128, %s722, %s695
        $region36: #{tpu_custom_call.1} parent=27 // pred_fallthru
          _
      $region28: #{tpu_custom_call.1} parent=5 // pred_fallthru
        _
      %p728 = scmp.le.s32.totalorder 2, %s16
      // Predicated region
      $region37: #{tpu_custom_call.1} parent=5 // pred_check
        %p729 = pneg %p728
      $region38: #{tpu_custom_call.1} parent=5 // pred_check_branch
        %731 = sbr.rel (%p729) target = $region40
      $region39: #{tpu_custom_call.1} parent=5 // pred_region
        %s732 = ssub.s32 %s16, 2
        // Predicated region
        $region41: #{tpu_custom_call.1} parent=39 // pred_check
          %p733 = pneg %p92
        $region42: #{tpu_custom_call.1} parent=39 // pred_check_branch
          %735 = sbr.rel (%p733) target = $region44
        $region43: #{tpu_custom_call.1} parent=39 // pred_region
          %s736 = sand.u32 %s77, 1
          %s737 = scalar_lea.sflag [#allocation3], %s736
          %s738 = sand.u32 %s77, 1
          %s739 = smul.addr %s738, 256
          %s740 = scalar_lea.vmem [#allocation2], %s739
          %741 = dma.done %s737, 4096
        $region44: #{tpu_custom_call.1} parent=39 // pred_fallthru
          _
        // Predicated region
        $region45: #{tpu_custom_call.1} parent=39 // pred_check
          %p742 = pneg %p118
        $region46: #{tpu_custom_call.1} parent=39 // pred_check_branch
          %744 = sbr.rel (%p742) target = $region48
        $region47: #{tpu_custom_call.1} parent=39 // pred_region
          %s745 = sand.u32 %s103, 1
          %s746 = scalar_lea.sflag [#allocation5], %s745
          %s747 = sand.u32 %s103, 1
          %s748 = smul.addr %s747, 8
          %s749 = scalar_lea.vmem [#allocation4], %s748
          %750 = dma.done %s746, 128
        $region48: #{tpu_custom_call.1} parent=39 // pred_fallthru
          _
      $region40: #{tpu_custom_call.1} parent=5 // pred_fallthru
        _
    $region6: #{tpu_custom_call.1} parent=1 // loop_footer
      %s20 = sadd.s32 1, %s16
    $region7: #{tpu_custom_call.1} parent=1 // loop_footer_branch
      %15 = sbr.rel target = $region3
    $region8: #{tpu_custom_call.1} parent=1 // loop_exit
      _
    %751 = vsyncpa [#allocation3], 1
    %s752 = scalar_lea.sflag [#allocation3], 1
    %753 = vsyncpa %s752, 1
    %754 = vsyncpa [#allocation5], 1
    %s755 = scalar_lea.sflag [#allocation5], 1
    %756 = vsyncpa %s755, 1

</llo_original>
